<compile_context>
chip_gen: v6e
topology: v6e:2x2x1
jax: 0.10.0
libtpu: 0.0.40
codegen_flags: <defaults>
</compile_context>

<pallas_src>
import functools

import jax
import jax.numpy as jnp
from jax.experimental import pallas as pl
from jax.experimental.pallas import tpu as pltpu


def _round_up(x, n):
    return ((x + n - 1) // n) * n


def _encoder_salience_kernel(x_ref, w_ref, b_ref, o_ref, *,
                             normalize, compute_dtype, approx_recip):
    # x_ref: (TM, D_in) native dtype; w_ref: (D_in, D_out) compute dtype
    # b_ref: (1, D_out) f32;           o_ref: (TM, D_out) out dtype
    x = x_ref[...].astype(compute_dtype)          # in-kernel cast (no wrapper pass)
    feat = jnp.dot(x, w_ref[...], preferred_element_type=jnp.float32) + b_ref[...]
    if normalize:
        # l2norm: X / (sqrt(sum(X^2, -1)) + eps)
        norm = jnp.sqrt(jnp.sum(feat * feat, axis=-1, keepdims=True)) + 1e-8
        feat = feat * pl.reciprocal(norm, approx=approx_recip)   # EUP slot
    o_ref[...] = feat.astype(o_ref.dtype)


def _vmem_budget_bytes():
    """Generation-aware VMEM budget (v7x: 64 MiB/core; v5e/v6e: 128 MiB)."""
    try:
        cap = int(pltpu.get_tpu_info().vmem_capacity_bytes)
    except Exception:                              # query unavailable: assume smallest
        cap = 64 * 1024 * 1024
    # 48 MiB scoped limit on v7x, 96 MiB on 128 MiB parts; keep Mosaic headroom.
    limit = max(32 << 20, min(cap - (16 << 20), 96 << 20))
    budget = limit - (8 << 20)
    return budget, limit


def _pick_block_m(m, d_in, d_out, *, x_bytes, w_bytes, out_bytes, cmp_bytes,
                  w_buffers, max_block_m, budget_bytes):
    """Largest row tile (multiple of 8) whose VMEM footprint fits the budget,
    capped at ~ceil(m/2) so the row grid has >= 2 steps (v7x has 2 TCs)."""
    fixed = w_buffers * d_in * d_out * w_bytes + 2 * d_out * 4    # resident W + bias
    per_row = (2 * d_in * x_bytes          # double-buffered x tiles
               + 2 * d_out * out_bytes     # double-buffered out tiles
               + d_in * cmp_bytes          # in-kernel cast temp
               + d_out * 4)                # f32 feature temp
    if fixed > budget_bytes:
        # TODO(synk): fall back to a D_out column-slab grid axis (needs a
        # two-pass l2norm) when the resident weight alone exceeds VMEM.
        raise ValueError(
            f"fc weight does not fit the VMEM budget: need {fixed} bytes, "
            f"budget {budget_bytes} bytes")
    bm = min(max_block_m, max(8, _round_up(pl.cdiv(m, 2), 8)))
    while bm > 8 and fixed + bm * per_row > budget_bytes:
        bm = max(8, (bm // 2) // 8 * 8)
    if bm >= m:
        bm = m          # single full block; block dim == array dim is always legal
    return bm


def prepare_salience_fc_params(weight, bias, compute_dtype=jnp.bfloat16):
    """One-time transform of the nn.Linear parameters, hoisted out of the
    per-call path: weight (D_out, D_in) -> (D_in, D_out) in the MXU compute
    dtype; bias -> (1, D_out) f32."""
    w_t = jnp.asarray(weight).T.astype(compute_dtype)
    b2d = jnp.asarray(bias).astype(jnp.float32).reshape(1, -1)
    return w_t, b2d


def encoder_image_salience(images, w_t, b2d, no_imgnorm=False, *,
                           out_dtype=None, approx_reciprocal=True,
                           max_block_m=2048):
    """JAX/Pallas equivalent of EncoderImage_salience.forward.

    images: [..., D_in] in its native dtype (cast happens inside the kernel).
    w_t:    [D_in, D_out] pre-transformed weight (prepare_salience_fc_params).
    b2d:    [1, D_out] f32 bias.
    """
    d_in, d_out = w_t.shape
    lead = images.shape[:-1]
    assert images.shape[-1] == d_in and b2d.shape == (1, d_out)

    x2d = images.reshape(-1, d_in)                 # no cast / no pad in the wrapper
    m = x2d.shape[0]
    out_dtype = images.dtype if out_dtype is None else out_dtype
    compute_dtype = w_t.dtype

    x_bytes = jnp.dtype(x2d.dtype).itemsize
    w_bytes = jnp.dtype(w_t.dtype).itemsize
    out_bytes = jnp.dtype(out_dtype).itemsize
    cmp_bytes = jnp.dtype(compute_dtype).itemsize

    # Single-buffer the grid-invariant weight when it is big enough to matter;
    # at tiny sizes (like the salience demo) the default double-buffer costs
    # nothing and keeps the simplest lowering path.
    single_buffer_w = d_in * d_out * w_bytes >= (256 << 10)
    w_buffers = 1 if single_buffer_w else 2

    budget_bytes, vmem_limit = _vmem_budget_bytes()
    block_m = _pick_block_m(m, d_in, d_out,
                            x_bytes=x_bytes, w_bytes=w_bytes,
                            out_bytes=out_bytes, cmp_bytes=cmp_bytes,
                            w_buffers=w_buffers, max_block_m=max_block_m,
                            budget_bytes=budget_bytes)
    grid = (pl.cdiv(m, block_m),)

    if single_buffer_w:
        w_spec = pl.BlockSpec((d_in, d_out), lambda i: (0, 0),
                              pipeline_mode=pl.Buffered(1))
    else:
        w_spec = pl.BlockSpec((d_in, d_out), lambda i: (0, 0))

    cost = pl.CostEstimate(
        flops=2 * m * d_in * d_out,
        transcendentals=(0 if no_imgnorm else 2 * m),
        bytes_accessed=(m * d_in * x_bytes + d_in * d_out * w_bytes
                        + d_out * 4 + m * d_out * out_bytes),
    )

    out = pl.pallas_call(
        functools.partial(_encoder_salience_kernel,
                          normalize=not no_imgnorm,
                          compute_dtype=compute_dtype,
                          approx_recip=approx_reciprocal),
        out_shape=jax.ShapeDtypeStruct((m, d_out), out_dtype),
        grid=grid,
        in_specs=[
            pl.BlockSpec((block_m, d_in), lambda i: (i, 0)),   # streamed row tiles
            w_spec,                                            # resident W
            pl.BlockSpec((1, d_out), lambda i: (0, 0)),        # resident bias
        ],
        out_specs=pl.BlockSpec((block_m, d_out), lambda i: (i, 0)),
        compiler_params=pltpu.CompilerParams(
            dimension_semantics=("parallel",),
            vmem_limit_bytes=vmem_limit,
        ),
        cost_estimate=cost,
    )(x2d, w_t, b2d)

    return out.reshape(*lead, d_out)


if __name__ == "__main__":
    key = jax.random.PRNGKey(0)
    k_img, k_w, k_b = jax.random.split(key, 3)

    B, R = 2, 8
    salience_img_dim = 32
    salience_embed_size = 32

    images = jax.random.normal(k_img, (B, R, salience_img_dim), dtype=jnp.float32)
    # init_weights(): fc.weight ~ uniform(-0.1, 0.1)
    weight = jax.random.uniform(
        k_w, (salience_embed_size, salience_img_dim),
        minval=-0.1, maxval=0.1, dtype=jnp.float32)
    bias = jax.random.uniform(
        k_b, (salience_embed_size,), minval=-0.1, maxval=0.1, dtype=jnp.float32)

    # One-time weight transform, hoisted out of the per-call path.
    w_t, b2d = prepare_salience_fc_params(weight, bias)

    features = encoder_image_salience(images, w_t, b2d)
    features = jax.block_until_ready(features)
    assert features.shape == (B, R, salience_embed_size)
    assert features.dtype == images.dtype

    # Pure-f32 reference of the PyTorch module; kernel uses bf16 MXU operands
    # + approx reciprocal, so compare at a bf16-appropriate tolerance.
    ref = images @ weight.T + bias
    ref = ref / (jnp.sqrt(jnp.sum(ref * ref, axis=-1, keepdims=True)) + 1e-8)
    max_err = float(jnp.max(jnp.abs(features - ref)))
    assert jnp.allclose(features, ref, atol=2e-2, rtol=2e-2), max_err

    print("KERNEL_OK")
</pallas_src>

<mosaic_0001>
module attributes {stable_mosaic.version = 11 : i64} {
  func.func @_encoder_salience_kernel(%arg0: i32, %arg1: memref<8x32xf32, #tpu.memory_space<vmem>>, %arg2: memref<32x32xbf16, #tpu.memory_space<vmem>>, %arg3: memref<1x32xf32, #tpu.memory_space<vmem>>, %arg4: memref<8x32xf32, #tpu.memory_space<vmem>>) attributes {dimension_semantics = [#tpu.dimension_semantics<parallel>], iteration_bounds = array<i64: 2>, scalar_prefetch = 0 : i64, scratch_operands = 0 : i64, tpu.core_type = #tpu.core_type<tc>, window_params = [{transform_indices = @transform_0, window_bounds = array<i64: 8, 32>}, {pipeline_mode = #tpu.pipeline_mode<synchronous>, transform_indices = @transform_1, window_bounds = array<i64: 32, 32>}, {pipeline_mode = #tpu.pipeline_mode<synchronous>, transform_indices = @transform_2, window_bounds = array<i64: 1, 32>}, {transform_indices = @transform_3, window_bounds = array<i64: 8, 32>}]} {
    %c0 = arith.constant 0 : index
    %c0_0 = arith.constant 0 : index
    %0 = vector.load %arg1[%c0, %c0_0] : memref<8x32xf32, #tpu.memory_space<vmem>>, vector<8x32xf32>
    %1 = arith.truncf %0 : vector<8x32xf32> to vector<8x32xbf16>
    %c0_1 = arith.constant 0 : index
    %c0_2 = arith.constant 0 : index
    %2 = vector.load %arg2[%c0_1, %c0_2] : memref<32x32xbf16, #tpu.memory_space<vmem>>, vector<32x32xbf16>
    %cst = arith.constant dense<0.000000e+00> : vector<8x32xf32>
    %3 = tpu.matmul %1, %2, %cst {dimension_numbers = #tpu.dot_dimension_numbers<[1], [0], [0], [1], [0, 0, 1, 1], [], []>} : vector<8x32xbf16>, vector<32x32xbf16>, vector<8x32xf32> -> vector<8x32xf32>
    %c0_3 = arith.constant 0 : index
    %c0_4 = arith.constant 0 : index
    %4 = vector.load %arg3[%c0_3, %c0_4] : memref<1x32xf32, #tpu.memory_space<vmem>>, vector<1x32xf32>
    %5 = vector.broadcast %4 : vector<1x32xf32> to vector<8x32xf32>
    %6 = arith.addf %3, %5 : vector<8x32xf32>
    %7 = arith.mulf %6, %6 : vector<8x32xf32>
    %cst_5 = arith.constant dense<0.000000e+00> : vector<8xf32>
    %8 = vector.multi_reduction <add>, %7, %cst_5 [1] : vector<8x32xf32> to vector<8xf32>
    %9 = vector.shape_cast %8 : vector<8xf32> to vector<8x1xf32>
    %10 = math.sqrt %9 : vector<8x1xf32>
    %cst_6 = arith.constant 9.99999993E-9 : f32
    %11 = vector.broadcast %cst_6 : f32 to vector<8x1xf32>
    %12 = arith.addf %10, %11 : vector<8x1xf32>
    %13 = tpu.reciprocal %12 {approx = true} : vector<8x1xf32> -> vector<8x1xf32>
    %14 = vector.broadcast %13 : vector<8x1xf32> to vector<8x32xf32>
    %15 = arith.mulf %6, %14 : vector<8x32xf32>
    %c0_7 = arith.constant 0 : index
    %c0_8 = arith.constant 0 : index
    %16 = vector.load %arg4[%c0_7, %c0_8] : memref<8x32xf32, #tpu.memory_space<vmem>>, vector<8x32xf32>
    tpu.vector_store %arg4[%c0_7, %c0_8], %15 {strides = array<i32>} : memref<8x32xf32, #tpu.memory_space<vmem>>, vector<8x32xf32>,
    return
  }
  func.func @transform_0(%arg0: i32) -> (i32, i32) {
    %c0_i32 = arith.constant 0 : i32
    %c0_i32_0 = arith.constant 0 : i32
    return %arg0, %c0_i32 : i32, i32
  }
  func.func @transform_1(%arg0: i32) -> (i32, i32) {
    %c0_i32 = arith.constant 0 : i32
    %c0_i32_0 = arith.constant 0 : i32
    %c0_i32_1 = arith.constant 0 : i32
    return %c0_i32, %c0_i32_0 : i32, i32
  }
  func.func @transform_2(%arg0: i32) -> (i32, i32) {
    %c0_i32 = arith.constant 0 : i32
    %c0_i32_0 = arith.constant 0 : i32
    %c0_i32_1 = arith.constant 0 : i32
    return %c0_i32, %c0_i32_0 : i32, i32
  }
  func.func @transform_3(%arg0: i32) -> (i32, i32) {
    %c0_i32 = arith.constant 0 : i32
    %c0_i32_0 = arith.constant 0 : i32
    return %arg0, %c0_i32 : i32, i32
  }
}

</mosaic_0001>

<llo_original>
// kernel: tpu_custom_call.1
$region0: #{tpu_custom_call.1}
  #allocation0 [shape = 'u32[]', space=smem, size = 0x4, offset = 0x4, fixed_abs, tag = 'smem constant byte address 0x4 - core index']
  #allocation1 [shape = 'u32[144,128]{1,0:T(1,128)}', space=vmem, size = 0x12000, scoped, tag = 'internal scratch']
  %s0 = inlined_call_operand.hbm [shape: f32[16,32], index: 0, kind: input, shape index: {}]
  %s1 = inlined_call_operand.hbm [shape: bf16[32,32], index: 1, kind: input, shape index: {}]
  %s2 = inlined_call_operand.vmem [shape: f32[1,32], index: 2, kind: input, shape index: {}]
  %s3 = inlined_call_operand.hbm [shape: f32[16,32], index: 3, kind: output, shape index: {}]
  %s4 = sld [smem:[#allocation0]]
  $region53: #{tpu_custom_call.1} parent=0
    _
  %s6 = ssub.s32 1, %s4
  %s7 = scalar_select 0, %s6, %s4
  $region1: #{tpu_custom_call.1} parent=0
    #allocation2 [shape = 'u8[8192]{0}', space=vmem, size = 0x2000, scoped, tag = 'input window, operand 0']
    #allocation3 [shape = 's32[2]{0}', space=sflag, size = 0x8, scoped, tag = 'scoped memory for tpu_custom_call.1']
    #allocation4 [shape = 's32[2]{0}', space=sflag, size = 0x8, scoped, tag = 'scoped memory for tpu_custom_call.1']
    #allocation5 [shape = 'u8[8192]{0}', space=vmem, size = 0x2000, scoped, tag = 'input window, operand 1, single buffered']
    #allocation6 [shape = 's32[1]{0}', space=sflag, size = 0x4, scoped, tag = 'scoped memory for tpu_custom_call.1']
    #allocation7 [shape = 'u8[8192]{0}', space=vmem, size = 0x2000, scoped, tag = 'output window, operand 0']
    %8 = vsyncpa [#allocation3], 0
    %s9 = scalar_lea.sflag [#allocation3], 1
    %10 = vsyncpa %s9, 0
    %11 = vsyncpa [#allocation6], 0
    %12 = vsyncpa [#allocation4], 0
    %s13 = scalar_lea.sflag [#allocation4], 1
    %14 = vsyncpa %s13, 0
    loop: start=0, step=1, limit=4
    $region2: #{tpu_custom_call.1} parent=1 // loop_pre_header
      _
    $region3: #{tpu_custom_call.1} parent=1 // loop_header
      %s16 = sphi 0, %s20
      %p17 = scmp.ge.s32.totalorder %s16, 4
      %s26 = sphi 0, %s28
      %s29 = sphi 0, %s26
      %s30 = sphi 0, %s29
      %s46 = sphi 0, %s30
      %s50 = sphi 0, %s50
      %s52 = sphi 0, %s50
      %s53 = sphi 0, %s52
      %s67 = sphi 0, %s53
      %s71 = sphi 0, %s71
      %s73 = sphi 0, %s71
      %s74 = sphi 0, %s73
      %s88 = sphi 0, %s74
      %s94 = sphi 0, %s96
      %s97 = sphi 0, %s94
      %s98 = sphi 0, %s97
      %s114 = sphi 0, %s98
    $region4: #{tpu_custom_call.1} parent=1 // loop_header_branch
      %19 = sbr.rel (%p17) target = $region8
    $region5: #{tpu_custom_call.1} parent=1 // loop_body
      %s21 = ssub.s32 %s16, 1
      %s22 = ssub.s32 %s16, 2
      %s23 = sadd.s32 %s16, 1
      %s24 = ssub.s32 %s16, %s23
      %p25 = scmp.eq.s32.totalorder %s24, 0
      %s27 = sadd.s32 %s26, 1
      %s28 = scalar_select %p25, %s26, %s27
      %p31 = pneg %p25
      %p32 = scmp.eq.s32.totalorder %s16, 1
      %p33 = por %p31, %p32
      %p34 = scmp.ne.s32.totalorder %s26, %s29
      %p35 = scmp.eq.s32.totalorder %s16, 0
      %p36 = por %p34, %p35
      %p37 = scmp.ne.s32.totalorder %s26, %s29
      %p38 = scmp.eq.s32.totalorder %s21, 1
      %p39 = por %p37, %p38
      %p40 = scmp.ne.s32.totalorder %s29, %s30
      %p41 = scmp.eq.s32.totalorder %s21, 0
      %p42 = por %p40, %p41
      %p43 = scmp.ne.s32.totalorder %s29, %s30
      %p44 = scmp.eq.s32.totalorder %s22, 1
      %p45 = por %p43, %p44
      %p47 = scmp.ne.s32.totalorder %s30, %s46
      %p48 = scmp.eq.s32.totalorder %s22, 0
      %p49 = por %p47, %p48
      %s51 = sadd.s32 %s50, 1
      %p54 = scmp.eq.s32.totalorder %s16, 1
      %p55 = scmp.ne.s32.totalorder %s50, %s52
      %p56 = scmp.eq.s32.totalorder %s16, 0
      %p57 = por %p55, %p56
      %p58 = scmp.ne.s32.totalorder %s50, %s52
      %p59 = scmp.eq.s32.totalorder %s21, 1
      %p60 = por %p58, %p59
      %p61 = scmp.ne.s32.totalorder %s52, %s53
      %p62 = scmp.eq.s32.totalorder %s21, 0
      %p63 = por %p61, %p62
      %p64 = scmp.ne.s32.totalorder %s52, %s53
      %p65 = scmp.eq.s32.totalorder %s22, 1
      %p66 = por %p64, %p65
      %p68 = scmp.ne.s32.totalorder %s53, %s67
      %p69 = scmp.eq.s32.totalorder %s22, 0
      %p70 = por %p68, %p69
      %s72 = sadd.s32 %s71, 1
      %p75 = scmp.eq.s32.totalorder %s16, 1
      %p76 = scmp.ne.s32.totalorder %s71, %s73
      %p77 = scmp.eq.s32.totalorder %s16, 0
      %p78 = por %p76, %p77
      %p79 = scmp.ne.s32.totalorder %s71, %s73
      %p80 = scmp.eq.s32.totalorder %s21, 1
      %p81 = por %p79, %p80
      %p82 = scmp.ne.s32.totalorder %s73, %s74
      %p83 = scmp.eq.s32.totalorder %s21, 0
      %p84 = por %p82, %p83
      %p85 = scmp.ne.s32.totalorder %s73, %s74
      %p86 = scmp.eq.s32.totalorder %s22, 1
      %p87 = por %p85, %p86
      %p89 = scmp.ne.s32.totalorder %s74, %s88
      %p90 = scmp.eq.s32.totalorder %s22, 0
      %p91 = por %p89, %p90
      %s92 = ssub.s32 %s16, %s23
      %p93 = scmp.eq.s32.totalorder %s92, 0
      %s95 = sadd.s32 %s94, 1
      %s96 = scalar_select %p93, %s94, %s95
      %p99 = pneg %p93
      %p100 = scmp.eq.s32.totalorder %s16, 1
      %p101 = por %p99, %p100
      %p102 = scmp.ne.s32.totalorder %s94, %s97
      %p103 = scmp.eq.s32.totalorder %s16, 0
      %p104 = por %p102, %p103
      %p105 = scmp.ne.s32.totalorder %s94, %s97
      %p106 = scmp.eq.s32.totalorder %s21, 1
      %p107 = por %p105, %p106
      %p108 = scmp.ne.s32.totalorder %s97, %s98
      %p109 = scmp.eq.s32.totalorder %s21, 0
      %p110 = por %p108, %p109
      %p111 = scmp.ne.s32.totalorder %s97, %s98
      %p112 = scmp.eq.s32.totalorder %s22, 1
      %p113 = por %p111, %p112
      %p115 = scmp.ne.s32.totalorder %s98, %s114
      %p116 = scmp.eq.s32.totalorder %s22, 0
      %p117 = por %p115, %p116
      %p118 = scmp.le.s32.totalorder 1, %s16
      %p119 = scmp.lt.s32.totalorder %s16, 3
      %p120 = pnand %p118, %p119
      %p121 = pneg %p120
      // Predicated region
      $region9: #{tpu_custom_call.1} parent=5 // pred_check
        _
      $region10: #{tpu_custom_call.1} parent=5 // pred_check_branch
        %123 = sbr.rel (%p120) target = $region12
      $region11: #{tpu_custom_call.1} parent=5 // pred_region
        %s124 = ssub.s32 %s16, 1
        // Predicated region
        $region13: #{tpu_custom_call.1} parent=11 // pred_check
          %p125 = pneg %p63
        $region14: #{tpu_custom_call.1} parent=11 // pred_check_branch
          %127 = sbr.rel (%p125) target = $region16
        $region15: #{tpu_custom_call.1} parent=11 // pred_region
          %s129 = ssub.s32 256, 256
          %130 = vsyncadd [#allocation6], %s129
          %s131 = sshll.u32 [#allocation5], 4
          %s132 = int_to_ptr.vmem [resolvable:$true] %s131
          %137 = dma.hbm_to_vmem [thread:$0]  %s1, 256, %s132, [#allocation6], 64, 64, 4
        $region16: #{tpu_custom_call.1} parent=11 // pred_fallthru
          _
        // Predicated region
        $region17: #{tpu_custom_call.1} parent=11 // pred_check
          %p138 = pneg %p84
        $region18: #{tpu_custom_call.1} parent=11 // pred_check_branch
          %140 = sbr.rel (%p138) target = $region20
        $region19: #{tpu_custom_call.1} parent=11 // pred_region
          _
        $region20: #{tpu_custom_call.1} parent=11 // pred_fallthru
          _
      $region12: #{tpu_custom_call.1} parent=5 // pred_fallthru
        _
      %p141 = scmp.lt.s32.totalorder %s16, 2
      // Predicated region
      $region21: #{tpu_custom_call.1} parent=5 // pred_check
        %p142 = pneg %p141
      $region22: #{tpu_custom_call.1} parent=5 // pred_check_branch
        %144 = sbr.rel (%p142) target = $region24
      $region23: #{tpu_custom_call.1} parent=5 // pred_region
        // Predicated region
        $region25: #{tpu_custom_call.1} parent=23 // pred_check
          %p145 = pneg %p36
        $region26: #{tpu_custom_call.1} parent=23 // pred_check_branch
          %147 = sbr.rel (%p145) target = $region28
        $region27: #{tpu_custom_call.1} parent=23 // pred_region
          %s148 = sand.u32 %s26, 1
          %s149 = scalar_lea.sflag [#allocation3], %s148
          %s150 = sand.u32 %s26, 1
          %s151 = smul.addr %s150, 8
          %s152 = scalar_lea.vmem [#allocation2], %s151
          %s154 = ssub.s32 128, 128
          %155 = vsyncadd %s149, %s154
          %s156 = smul.addr %s16, 128
          %s157 = scalar_lea.hbm %s0, %s156
          %s159 = sshll.u32 %s152, 4
          %s160 = int_to_ptr.vmem [resolvable:$true] %s159
          %162 = dma.hbm_to_vmem [thread:$0]  %s157, 128, %s160, %s149
        $region28: #{tpu_custom_call.1} parent=23 // pred_fallthru
          _
      $region24: #{tpu_custom_call.1} parent=5 // pred_fallthru
        _
      %p163 = scmp.le.s32.totalorder 1, %s16
      %p164 = scmp.lt.s32.totalorder %s16, 3
      %p165 = pnand %p163, %p164
      %p166 = pneg %p165
      // Predicated region
      $region29: #{tpu_custom_call.1} parent=5 // pred_check
        _
      $region30: #{tpu_custom_call.1} parent=5 // pred_check_branch
        %168 = sbr.rel (%p165) target = $region32
      $region31: #{tpu_custom_call.1} parent=5 // pred_region
        %s169 = ssub.s32 %s16, 1
        %s170 = sand.u32 %s29, 1
        %s171 = scalar_lea.sflag [#allocation3], %s170
        %s172 = sand.u32 %s29, 1
        %s173 = smul.addr %s172, 8
        %s174 = scalar_lea.vmem [#allocation2], %s173
        // Predicated region
        $region33: #{tpu_custom_call.1} parent=31 // pred_check
          %p175 = pneg %p42
        $region34: #{tpu_custom_call.1} parent=31 // pred_check_branch
          %177 = sbr.rel (%p175) target = $region36
        $region35: #{tpu_custom_call.1} parent=31 // pred_region
          %178 = dma.done %s171, 128
        $region36: #{tpu_custom_call.1} parent=31 // pred_fallthru
          _
        // Predicated region
        $region37: #{tpu_custom_call.1} parent=31 // pred_check
          %p179 = pneg %p63
        $region38: #{tpu_custom_call.1} parent=31 // pred_check_branch
          %181 = sbr.rel (%p179) target = $region40
        $region39: #{tpu_custom_call.1} parent=31 // pred_region
          %182 = dma.done [#allocation6], 256
        $region40: #{tpu_custom_call.1} parent=31 // pred_fallthru
          _
        %s183 = sand.u32 %s29, 1
        %s184 = scalar_lea.sflag [#allocation3], %s183
        %s185 = sand.u32 %s29, 1
        %s186 = smul.addr %s185, 8
        %s187 = scalar_lea.vmem [#allocation2], %s186
        %p188 = pneg %p42
        %p189 = pneg %p39
        %p190 = pneg %p63
        %p191 = pneg %p60
        %p192 = pneg %p84
        %p193 = pneg %p81
        %p194 = pneg %p110
        %p195 = pneg %p107
        %s196 = sand.u32 %s97, 1
        %s197 = scalar_lea.sflag [#allocation4], %s196
        %s198 = sand.u32 %s97, 1
        %s199 = smul.addr %s198, 8
        %s200 = scalar_lea.vmem [#allocation7], %s199
        %v202 = vld [vmem:[%s174] sm:$0xff]
        %v203 = vpack.c.bf16 %v202, %v202
        %v204 = vld [vmem:[#allocation5] sm:$0xf]
        %v205 = vld [vmem:[#allocation5 + $0x4] sm:$0xf]
        %v206 = vld [vmem:[#allocation5 + $0x8] sm:$0xf]
        %v207 = vld [vmem:[#allocation5 + $0xc] sm:$0xf]
        %v208 = vld [vmem:[%s2] sm:$0x1]
        %v210 = vlaneseq
        %v211 = vshrl.u32 %v210, 7
        %v212 = vsub.s32 0, %v211
        %v213 = vrot.slane %v208, %v212
        %v219 = vunpack.c.l.b16 %v204
        %v220 = vunpack.c.l.b16 %v205
        %v221 = vunpack.c.l.b16 %v206
        %v222 = vunpack.c.l.b16 %v207
        %v223 = vpack.c.b16 %v220, %v219
        %v224 = vpack.c.b16 %v222, %v221
        %vm227 = vcmask 261120
        %v229 = vsel %vm227, %v203, 0
        %231 = vmatprep.subr.bf16.mxu0 0
        %232 = vmatpush1.bf16.msra.mxu0 0
        %233 = vmatprep.subr.bf16.mxu0 0
        %234 = vmatpush1.bf16.msra.mxu0 0
        %235 = vmatprep.subr.bf16.mxu0 0
        %236 = vmatpush1.bf16.msra.mxu0 0
        %237 = vmatprep.subr.bf16.mxu0 0
        %238 = vmatpush1.bf16.msra.mxu0 0
        %239 = vmatprep.subr.bf16.mxu0 0
        %240 = vmatpush1.bf16.msra.mxu0 0
        %241 = vmatprep.subr.bf16.mxu0 0
        %242 = vmatpush1.bf16.msra.mxu0 0
        %243 = vmatprep.subr.bf16.mxu0 0
        %244 = vmatpush1.bf16.msra.mxu0 %v224
        %245 = vmatprep.subr.bf16.mxu0 0
        %246 = vmatpush1.bf16.msra.mxu0 %v223
        %247 = vmatprep.subr.bf16.mxu0 0
        %248 = vmatpush2.bf16.msra.mxu0 0
        %249 = vmatprep.subr.bf16.mxu0 0
        %250 = vmatpush2.bf16.msra.mxu0 0
        %251 = vmatprep.subr.bf16.mxu0 0
        %252 = vmatpush2.bf16.msra.mxu0 0
        %253 = vmatprep.subr.bf16.mxu0 0
        %254 = vmatpush2.bf16.msra.mxu0 0
        %255 = vmatprep.subr.bf16.mxu0 0
        %256 = vmatpush2.bf16.msra.mxu0 0
        %257 = vmatprep.subr.bf16.mxu0 0
        %258 = vmatpush2.bf16.msra.mxu0 0
        %259 = vmatprep.subr.bf16.mxu0 0
        %260 = vmatpush2.bf16.msra.mxu0 0
        %261 = vmatprep.subr.bf16.mxu0 0
        %262 = vmatpush2.bf16.msra.mxu0 0
        %263 = vmatprep.mubr.bf16.mxu0 0
        %264 = vmatmul.mubr.bf16.gmra.mxu0 %v229
        %v265 = vpop.f32.mrf.mxu0
        %v266 = vadd.f32 %v213, %v265
        %v267 = vpop.f32.mrf.mxu0
        %v268 = vpop.f32.mrf.mxu0
        %v269 = vpop.f32.mrf.mxu0
        %270 = vdwg.mxu0
        %v271 = vmul.f32 %v266, %v266
        %v272 = vsel %vm227, %v271, 0.0
        %273 = vadd.xlane.f32.xlu0 %v272
        %v274 = vpop.xlane.xlu0 %273
        %v275 = vrsqrt.pop %v274
        %v276 = vmul.f32 %v274, %v275
        %vm277 = vcmp.eq.f32.partialorder %v274, inf
        %v278 = vsel %vm277, %v274, %v276
        %vm279 = vcmp.eq.f32.partialorder %v274, 0.0
        %v280 = vand.u32 %v274, 2147483648
        %v281 = vsel %vm279, %v280, %v278
        %v282 = vadd.f32 %v281, 1e-08
        %v283 = vrcp.pop %v282
        %v284 = vmul.f32 %v266, %v283
        %285 = vst.msk [vmem:[%s200] sm:$0xff] %vm227, %v284
        %s286 = sand.u32 %s97, 1
        %s287 = scalar_lea.sflag [#allocation4], %s286
        %s288 = sand.u32 %s97, 1
        %s289 = smul.addr %s288, 8
        %s290 = scalar_lea.vmem [#allocation7], %s289
        // Predicated region
        $region41: #{tpu_custom_call.1} parent=31 // pred_check
          %p291 = pneg %p107
        $region42: #{tpu_custom_call.1} parent=31 // pred_check_branch
          %293 = sbr.rel (%p291) target = $region44
        $region43: #{tpu_custom_call.1} parent=31 // pred_region
          %s295 = ssub.s32 128, 128
          %296 = vsyncadd %s287, %s295
          %s297 = smul.addr %s21, 128
          %s298 = scalar_lea.hbm %s3, %s297
          %s300 = sshll.u32 %s290, 4
          %s301 = int_to_ptr.vmem [resolvable:$true] %s300
          %303 = dma.vmem_to_hbm [thread:$0]  %s301, 128, %s298, %s287
        $region44: #{tpu_custom_call.1} parent=31 // pred_fallthru
          _
      $region32: #{tpu_custom_call.1} parent=5 // pred_fallthru
        _
      %p304 = scmp.le.s32.totalorder 2, %s16
      // Predicated region
      $region45: #{tpu_custom_call.1} parent=5 // pred_check
        %p305 = pneg %p304
      $region46: #{tpu_custom_call.1} parent=5 // pred_check_branch
        %307 = sbr.rel (%p305) target = $region48
      $region47: #{tpu_custom_call.1} parent=5 // pred_region
        %s308 = ssub.s32 %s16, 2
        // Predicated region
        $region49: #{tpu_custom_call.1} parent=47 // pred_check
          %p309 = pneg %p113
        $region50: #{tpu_custom_call.1} parent=47 // pred_check_branch
          %311 = sbr.rel (%p309) target = $region52
        $region51: #{tpu_custom_call.1} parent=47 // pred_region
          %s312 = sand.u32 %s98, 1
          %s313 = scalar_lea.sflag [#allocation4], %s312
          %s314 = sand.u32 %s98, 1
          %s315 = smul.addr %s314, 8
          %s316 = scalar_lea.vmem [#allocation7], %s315
          %317 = dma.done %s313, 128
        $region52: #{tpu_custom_call.1} parent=47 // pred_fallthru
          _
      $region48: #{tpu_custom_call.1} parent=5 // pred_fallthru
        _
    $region6: #{tpu_custom_call.1} parent=1 // loop_footer
      %s20 = sadd.s32 1, %s16
    $region7: #{tpu_custom_call.1} parent=1 // loop_footer_branch
      %15 = sbr.rel target = $region3
    $region8: #{tpu_custom_call.1} parent=1 // loop_exit
      _
    %318 = vsyncpa [#allocation3], 1
    %s319 = scalar_lea.sflag [#allocation3], 1
    %320 = vsyncpa %s319, 1
    %321 = vsyncpa [#allocation6], 1
    %322 = vsyncpa [#allocation4], 1
    %s323 = scalar_lea.sflag [#allocation4], 1
    %324 = vsyncpa %s323, 1

</llo_original>
